<compile_context>
chip_gen: v7x
topology: tpu7x:2x2x1
jax: 0.10.0
libtpu: 0.0.40
codegen_flags: <defaults>
</compile_context>

<pallas_src>
import jax
import jax.numpy as jnp
from jax import lax
from jax.experimental import pallas as pl
from jax.experimental.pallas import tpu as pltpu

INPUT_SIZE = 16
HIDDEN_SIZE = 32
OUTPUT_SIZE = 4
FC2_OUT = 32          # fixed by the module: nn.Linear(input_size, 32)
SEQ_LEN = 8


def _sigmoid(x):
    # tanh-based sigmoid: one EUP transcendental, no VPU divide.
    return 0.5 * (jnp.tanh(0.5 * x) + 1.0)


def _lstm_linear_kernel(x_ref, w2_ref, b2_ref, wih_ref, whh_ref, bl_ref,
                        w1_ref, b1_ref, out_ref):
    """Whole forward pass; all operands live in VMEM, state lives in vregs.

    Gate packing order (done in the wrapper): i, f, o (sigmoid) then g (tanh),
    so one contiguous (1, 3H) slab gets sigmoid and one (1, H) slab gets tanh.
    """
    T = x_ref.shape[0]
    H = whh_ref.shape[0]

    # ---- fc2 + sigmoid: one batched matmul over all timesteps ----
    y = _sigmoid(
        jnp.dot(x_ref[...], w2_ref[...], preferred_element_type=jnp.float32)
        + b2_ref[...])                                            # (T, 32)

    # ---- hoisted input projection (+ combined LSTM bias) for all T ----
    gates_x = (jnp.dot(y, wih_ref[...], preferred_element_type=jnp.float32)
               + bl_ref[...])                                     # (T, 4H)

    whh = whh_ref[...]                                            # (H, 4H)

    # ---- LSTM recurrence, fully unrolled (T static); h, c stay in vregs ----
    h = jnp.zeros((1, H), jnp.float32)
    c = jnp.zeros((1, H), jnp.float32)
    for t in range(T):
        gates = gates_x[t:t + 1, :] + jnp.dot(
            h, whh, preferred_element_type=jnp.float32)           # (1, 4H)
        sig = _sigmoid(gates[:, 0:3 * H])                         # i | f | o
        i_g = sig[:, 0:H]
        f_g = sig[:, H:2 * H]
        o_g = sig[:, 2 * H:3 * H]
        g_g = jnp.tanh(gates[:, 3 * H:4 * H])
        c = f_g * c + i_g * g_g
        h = o_g * jnp.tanh(c)

    # ---- fc1 only on the final hidden state ----
    out_ref[...] = (jnp.dot(h, w1_ref[...], preferred_element_type=jnp.float32)
                    + b1_ref[...])


@jax.jit
def lstm_linear_before_after(x, w2_t, b2, wih_t, whh_t, b_lstm, w1_t, b1):
    out_dim = w1_t.shape[1]

    def vmem_spec():
        return pl.BlockSpec(memory_space=pltpu.MemorySpace.VMEM)

    out = pl.pallas_call(
        _lstm_linear_kernel,
        out_shape=jax.ShapeDtypeStruct((1, out_dim), jnp.float32),
        in_specs=[vmem_spec() for _ in range(8)],
        out_specs=vmem_spec(),
    )(x, w2_t, b2, wih_t, whh_t, b_lstm, w1_t, b1)

    # PyTorch: return out[-1][0] — fc1 of the last timestep, feature 0.
    return out[0, 0]


def init_params(key, input_size, hidden_size, output_size):
    """Deterministic PyTorch-style uniform init; returns RAW (untransposed)
    parameters in PyTorch's native layout / gate order (i, f, g, o)."""
    ks = jax.random.split(key, 8)

    def unif(k, shape, fan_in):
        bound = 1.0 / jnp.sqrt(jnp.float32(fan_in))
        return jax.random.uniform(k, shape, jnp.float32, -bound, bound)

    # fc2: Linear(input_size, 32)
    w2 = unif(ks[0], (FC2_OUT, input_size), input_size)
    b2 = unif(ks[1], (FC2_OUT,), input_size)
    # lstm: LSTM(32, hidden_size) — gate order i, f, g, o
    wih = unif(ks[2], (4 * hidden_size, FC2_OUT), hidden_size)
    whh = unif(ks[3], (4 * hidden_size, hidden_size), hidden_size)
    bih = unif(ks[4], (4 * hidden_size,), hidden_size)
    bhh = unif(ks[5], (4 * hidden_size,), hidden_size)
    # fc1: Linear(hidden_size, output_size)
    w1 = unif(ks[6], (output_size, hidden_size), hidden_size)
    b1 = unif(ks[7], (output_size,), hidden_size)

    return w2, b2, wih, whh, bih, bhh, w1, b1


def pack_params(w2, b2, wih, whh, bih, bhh, w1, b1, hidden_size):
    """Kernel-side packing: pre-transpose for row-major matmuls, combine the
    two LSTM biases, and regroup gates from PyTorch order (i, f, g, o) to
    kernel order (i, f, o, g) so sigmoid gates form one contiguous slab."""
    H = hidden_size
    perm = jnp.concatenate([
        jnp.arange(0, H),            # i
        jnp.arange(H, 2 * H),        # f
        jnp.arange(3 * H, 4 * H),    # o
        jnp.arange(2 * H, 3 * H),    # g
    ])
    return (w2.T, b2.reshape(1, -1),
            wih[perm].T, whh[perm].T, (bih + bhh)[perm].reshape(1, -1),
            w1.T, b1.reshape(1, -1))


def _reference_forward(x, w2, b2, wih, whh, bih, bhh, w1, b1):
    """Pure-JAX reference of the PyTorch forward pass (PyTorch gate order)."""
    H = whh.shape[1]
    y = jax.nn.sigmoid(x @ w2.T + b2)                       # (T, 32)

    def step(carry, y_t):
        h, c = carry
        gates = y_t @ wih.T + h @ whh.T + bih + bhh         # (4H,)
        i_g = jax.nn.sigmoid(gates[0:H])
        f_g = jax.nn.sigmoid(gates[H:2 * H])
        g_g = jnp.tanh(gates[2 * H:3 * H])
        o_g = jax.nn.sigmoid(gates[3 * H:4 * H])
        c_new = f_g * c + i_g * g_g
        h_new = o_g * jnp.tanh(c_new)
        return (h_new, c_new), h_new

    h0 = jnp.zeros((H,), jnp.float32)
    c0 = jnp.zeros((H,), jnp.float32)
    _, hs = lax.scan(step, (h0, c0), y)                     # (T, H)
    out = hs @ w1.T + b1                                    # (T, output_size)
    return out[-1, 0]


if __name__ == "__main__":
    key = jax.random.PRNGKey(0)
    k_x, k_p = jax.random.split(key)

    x = jax.random.normal(k_x, (SEQ_LEN, INPUT_SIZE), jnp.float32)
    raw_params = init_params(k_p, INPUT_SIZE, HIDDEN_SIZE, OUTPUT_SIZE)
    packed = pack_params(*raw_params, hidden_size=HIDDEN_SIZE)

    result = lstm_linear_before_after(x, *packed)
    result = jax.block_until_ready(result)

    ref = _reference_forward(x, *raw_params)
    assert jnp.allclose(result, ref, rtol=1e-4, atol=1e-5), (result, ref)

    print("KERNEL_OK")
</pallas_src>

<mosaic_0001>
module attributes {stable_mosaic.version = 11 : i64} {
  func.func @_lstm_linear_kernel(%arg0: memref<8x16xf32, #tpu.memory_space<vmem>>, %arg1: memref<16x32xf32, #tpu.memory_space<vmem>>, %arg2: memref<1x32xf32, #tpu.memory_space<vmem>>, %arg3: memref<32x128xf32, #tpu.memory_space<vmem>>, %arg4: memref<32x128xf32, #tpu.memory_space<vmem>>, %arg5: memref<1x128xf32, #tpu.memory_space<vmem>>, %arg6: memref<32x4xf32, #tpu.memory_space<vmem>>, %arg7: memref<1x4xf32, #tpu.memory_space<vmem>>, %arg8: memref<1x4xf32, #tpu.memory_space<vmem>>) attributes {dimension_semantics = [], scalar_prefetch = 0 : i64, scratch_operands = 0 : i64, tpu.core_type = #tpu.core_type<tc>} {
    %c0 = arith.constant 0 : index
    %c0_0 = arith.constant 0 : index
    %0 = vector.load %arg0[%c0, %c0_0] : memref<8x16xf32, #tpu.memory_space<vmem>>, vector<8x16xf32>
    %c0_1 = arith.constant 0 : index
    %c0_2 = arith.constant 0 : index
    %1 = vector.load %arg1[%c0_1, %c0_2] : memref<16x32xf32, #tpu.memory_space<vmem>>, vector<16x32xf32>
    %cst = arith.constant dense<0.000000e+00> : vector<8x32xf32>
    %2 = tpu.matmul %0, %1, %cst {dimension_numbers = #tpu.dot_dimension_numbers<[1], [0], [0], [1], [0, 0, 1, 1], [], []>} : vector<8x16xf32>, vector<16x32xf32>, vector<8x32xf32> -> vector<8x32xf32>
    %c0_3 = arith.constant 0 : index
    %c0_4 = arith.constant 0 : index
    %3 = vector.load %arg2[%c0_3, %c0_4] : memref<1x32xf32, #tpu.memory_space<vmem>>, vector<1x32xf32>
    %4 = vector.broadcast %3 : vector<1x32xf32> to vector<8x32xf32>
    %5 = arith.addf %2, %4 : vector<8x32xf32>
    %cst_5 = arith.constant 5.000000e-01 : f32
    %6 = vector.broadcast %cst_5 : f32 to vector<8x32xf32>
    %7 = arith.mulf %6, %5 : vector<8x32xf32>
    %8 = math.tanh %7 : vector<8x32xf32>
    %cst_6 = arith.constant 1.000000e+00 : f32
    %9 = vector.broadcast %cst_6 : f32 to vector<8x32xf32>
    %10 = arith.addf %8, %9 : vector<8x32xf32>
    %cst_7 = arith.constant 5.000000e-01 : f32
    %11 = vector.broadcast %cst_7 : f32 to vector<8x32xf32>
    %12 = arith.mulf %11, %10 : vector<8x32xf32>
    %c0_8 = arith.constant 0 : index
    %c0_9 = arith.constant 0 : index
    %13 = vector.load %arg3[%c0_8, %c0_9] : memref<32x128xf32, #tpu.memory_space<vmem>>, vector<32x128xf32>
    %cst_10 = arith.constant dense<0.000000e+00> : vector<8x128xf32>
    %14 = tpu.matmul %12, %13, %cst_10 {dimension_numbers = #tpu.dot_dimension_numbers<[1], [0], [0], [1], [0, 0, 1, 1], [], []>} : vector<8x32xf32>, vector<32x128xf32>, vector<8x128xf32> -> vector<8x128xf32>
    %c0_11 = arith.constant 0 : index
    %c0_12 = arith.constant 0 : index
    %15 = vector.load %arg5[%c0_11, %c0_12] : memref<1x128xf32, #tpu.memory_space<vmem>>, vector<1x128xf32>
    %16 = vector.broadcast %15 : vector<1x128xf32> to vector<8x128xf32>
    %17 = arith.addf %14, %16 : vector<8x128xf32>
    %c0_13 = arith.constant 0 : index
    %c0_14 = arith.constant 0 : index
    %18 = vector.load %arg4[%c0_13, %c0_14] : memref<32x128xf32, #tpu.memory_space<vmem>>, vector<32x128xf32>
    %cst_15 = arith.constant 0.000000e+00 : f32
    %19 = vector.broadcast %cst_15 : f32 to vector<1x32xf32>
    %cst_16 = arith.constant 0.000000e+00 : f32
    %20 = vector.broadcast %cst_16 : f32 to vector<1x32xf32>
    %21 = vector.extract_strided_slice %17 {offsets = [0, 0], sizes = [1, 128], strides = [1, 1]} : vector<8x128xf32> to vector<1x128xf32>
    %cst_17 = arith.constant dense<0.000000e+00> : vector<1x128xf32>
    %22 = tpu.matmul %19, %18, %cst_17 {dimension_numbers = #tpu.dot_dimension_numbers<[1], [0], [0], [1], [0, 0, 1, 1], [], []>} : vector<1x32xf32>, vector<32x128xf32>, vector<1x128xf32> -> vector<1x128xf32>
    %23 = arith.addf %21, %22 : vector<1x128xf32>
    %24 = vector.extract_strided_slice %23 {offsets = [0, 0], sizes = [1, 96], strides = [1, 1]} : vector<1x128xf32> to vector<1x96xf32>
    %cst_18 = arith.constant 5.000000e-01 : f32
    %25 = vector.broadcast %cst_18 : f32 to vector<1x96xf32>
    %26 = arith.mulf %25, %24 : vector<1x96xf32>
    %27 = math.tanh %26 : vector<1x96xf32>
    %cst_19 = arith.constant 1.000000e+00 : f32
    %28 = vector.broadcast %cst_19 : f32 to vector<1x96xf32>
    %29 = arith.addf %27, %28 : vector<1x96xf32>
    %cst_20 = arith.constant 5.000000e-01 : f32
    %30 = vector.broadcast %cst_20 : f32 to vector<1x96xf32>
    %31 = arith.mulf %30, %29 : vector<1x96xf32>
    %32 = vector.extract_strided_slice %31 {offsets = [0, 0], sizes = [1, 32], strides = [1, 1]} : vector<1x96xf32> to vector<1x32xf32>
    %33 = vector.extract_strided_slice %31 {offsets = [0, 32], sizes = [1, 32], strides = [1, 1]} : vector<1x96xf32> to vector<1x32xf32>
    %34 = vector.extract_strided_slice %31 {offsets = [0, 64], sizes = [1, 32], strides = [1, 1]} : vector<1x96xf32> to vector<1x32xf32>
    %35 = vector.extract_strided_slice %23 {offsets = [0, 96], sizes = [1, 32], strides = [1, 1]} : vector<1x128xf32> to vector<1x32xf32>
    %36 = math.tanh %35 : vector<1x32xf32>
    %37 = arith.mulf %33, %20 : vector<1x32xf32>
    %38 = arith.mulf %32, %36 : vector<1x32xf32>
    %39 = arith.addf %37, %38 : vector<1x32xf32>
    %40 = math.tanh %39 : vector<1x32xf32>
    %41 = arith.mulf %34, %40 : vector<1x32xf32>
    %42 = vector.extract_strided_slice %17 {offsets = [1, 0], sizes = [1, 128], strides = [1, 1]} : vector<8x128xf32> to vector<1x128xf32>
    %cst_21 = arith.constant dense<0.000000e+00> : vector<1x128xf32>
    %43 = tpu.matmul %41, %18, %cst_21 {dimension_numbers = #tpu.dot_dimension_numbers<[1], [0], [0], [1], [0, 0, 1, 1], [], []>} : vector<1x32xf32>, vector<32x128xf32>, vector<1x128xf32> -> vector<1x128xf32>
    %44 = arith.addf %42, %43 : vector<1x128xf32>
    %45 = vector.extract_strided_slice %44 {offsets = [0, 0], sizes = [1, 96], strides = [1, 1]} : vector<1x128xf32> to vector<1x96xf32>
    %cst_22 = arith.constant 5.000000e-01 : f32
    %46 = vector.broadcast %cst_22 : f32 to vector<1x96xf32>
    %47 = arith.mulf %46, %45 : vector<1x96xf32>
    %48 = math.tanh %47 : vector<1x96xf32>
    %cst_23 = arith.constant 1.000000e+00 : f32
    %49 = vector.broadcast %cst_23 : f32 to vector<1x96xf32>
    %50 = arith.addf %48, %49 : vector<1x96xf32>
    %cst_24 = arith.constant 5.000000e-01 : f32
    %51 = vector.broadcast %cst_24 : f32 to vector<1x96xf32>
    %52 = arith.mulf %51, %50 : vector<1x96xf32>
    %53 = vector.extract_strided_slice %52 {offsets = [0, 0], sizes = [1, 32], strides = [1, 1]} : vector<1x96xf32> to vector<1x32xf32>
    %54 = vector.extract_strided_slice %52 {offsets = [0, 32], sizes = [1, 32], strides = [1, 1]} : vector<1x96xf32> to vector<1x32xf32>
    %55 = vector.extract_strided_slice %52 {offsets = [0, 64], sizes = [1, 32], strides = [1, 1]} : vector<1x96xf32> to vector<1x32xf32>
    %56 = vector.extract_strided_slice %44 {offsets = [0, 96], sizes = [1, 32], strides = [1, 1]} : vector<1x128xf32> to vector<1x32xf32>
    %57 = math.tanh %56 : vector<1x32xf32>
    %58 = arith.mulf %54, %39 : vector<1x32xf32>
    %59 = arith.mulf %53, %57 : vector<1x32xf32>
    %60 = arith.addf %58, %59 : vector<1x32xf32>
    %61 = math.tanh %60 : vector<1x32xf32>
    %62 = arith.mulf %55, %61 : vector<1x32xf32>
    %63 = vector.extract_strided_slice %17 {offsets = [2, 0], sizes = [1, 128], strides = [1, 1]} : vector<8x128xf32> to vector<1x128xf32>
    %cst_25 = arith.constant dense<0.000000e+00> : vector<1x128xf32>
    %64 = tpu.matmul %62, %18, %cst_25 {dimension_numbers = #tpu.dot_dimension_numbers<[1], [0], [0], [1], [0, 0, 1, 1], [], []>} : vector<1x32xf32>, vector<32x128xf32>, vector<1x128xf32> -> vector<1x128xf32>
    %65 = arith.addf %63, %64 : vector<1x128xf32>
    %66 = vector.extract_strided_slice %65 {offsets = [0, 0], sizes = [1, 96], strides = [1, 1]} : vector<1x128xf32> to vector<1x96xf32>
    %cst_26 = arith.constant 5.000000e-01 : f32
    %67 = vector.broadcast %cst_26 : f32 to vector<1x96xf32>
    %68 = arith.mulf %67, %66 : vector<1x96xf32>
    %69 = math.tanh %68 : vector<1x96xf32>
    %cst_27 = arith.constant 1.000000e+00 : f32
    %70 = vector.broadcast %cst_27 : f32 to vector<1x96xf32>
    %71 = arith.addf %69, %70 : vector<1x96xf32>
    %cst_28 = arith.constant 5.000000e-01 : f32
    %72 = vector.broadcast %cst_28 : f32 to vector<1x96xf32>
    %73 = arith.mulf %72, %71 : vector<1x96xf32>
    %74 = vector.extract_strided_slice %73 {offsets = [0, 0], sizes = [1, 32], strides = [1, 1]} : vector<1x96xf32> to vector<1x32xf32>
    %75 = vector.extract_strided_slice %73 {offsets = [0, 32], sizes = [1, 32], strides = [1, 1]} : vector<1x96xf32> to vector<1x32xf32>
    %76 = vector.extract_strided_slice %73 {offsets = [0, 64], sizes = [1, 32], strides = [1, 1]} : vector<1x96xf32> to vector<1x32xf32>
    %77 = vector.extract_strided_slice %65 {offsets = [0, 96], sizes = [1, 32], strides = [1, 1]} : vector<1x128xf32> to vector<1x32xf32>
    %78 = math.tanh %77 : vector<1x32xf32>
    %79 = arith.mulf %75, %60 : vector<1x32xf32>
    %80 = arith.mulf %74, %78 : vector<1x32xf32>
    %81 = arith.addf %79, %80 : vector<1x32xf32>
    %82 = math.tanh %81 : vector<1x32xf32>
    %83 = arith.mulf %76, %82 : vector<1x32xf32>
    %84 = vector.extract_strided_slice %17 {offsets = [3, 0], sizes = [1, 128], strides = [1, 1]} : vector<8x128xf32> to vector<1x128xf32>
    %cst_29 = arith.constant dense<0.000000e+00> : vector<1x128xf32>
    %85 = tpu.matmul %83, %18, %cst_29 {dimension_numbers = #tpu.dot_dimension_numbers<[1], [0], [0], [1], [0, 0, 1, 1], [], []>} : vector<1x32xf32>, vector<32x128xf32>, vector<1x128xf32> -> vector<1x128xf32>
    %86 = arith.addf %84, %85 : vector<1x128xf32>
    %87 = vector.extract_strided_slice %86 {offsets = [0, 0], sizes = [1, 96], strides = [1, 1]} : vector<1x128xf32> to vector<1x96xf32>
    %cst_30 = arith.constant 5.000000e-01 : f32
    %88 = vector.broadcast %cst_30 : f32 to vector<1x96xf32>
    %89 = arith.mulf %88, %87 : vector<1x96xf32>
    %90 = math.tanh %89 : vector<1x96xf32>
    %cst_31 = arith.constant 1.000000e+00 : f32
    %91 = vector.broadcast %cst_31 : f32 to vector<1x96xf32>
    %92 = arith.addf %90, %91 : vector<1x96xf32>
    %cst_32 = arith.constant 5.000000e-01 : f32
    %93 = vector.broadcast %cst_32 : f32 to vector<1x96xf32>
    %94 = arith.mulf %93, %92 : vector<1x96xf32>
    %95 = vector.extract_strided_slice %94 {offsets = [0, 0], sizes = [1, 32], strides = [1, 1]} : vector<1x96xf32> to vector<1x32xf32>
    %96 = vector.extract_strided_slice %94 {offsets = [0, 32], sizes = [1, 32], strides = [1, 1]} : vector<1x96xf32> to vector<1x32xf32>
    %97 = vector.extract_strided_slice %94 {offsets = [0, 64], sizes = [1, 32], strides = [1, 1]} : vector<1x96xf32> to vector<1x32xf32>
    %98 = vector.extract_strided_slice %86 {offsets = [0, 96], sizes = [1, 32], strides = [1, 1]} : vector<1x128xf32> to vector<1x32xf32>
    %99 = math.tanh %98 : vector<1x32xf32>
    %100 = arith.mulf %96, %81 : vector<1x32xf32>
    %101 = arith.mulf %95, %99 : vector<1x32xf32>
    %102 = arith.addf %100, %101 : vector<1x32xf32>
    %103 = math.tanh %102 : vector<1x32xf32>
    %104 = arith.mulf %97, %103 : vector<1x32xf32>
    %105 = vector.extract_strided_slice %17 {offsets = [4, 0], sizes = [1, 128], strides = [1, 1]} : vector<8x128xf32> to vector<1x128xf32>
    %cst_33 = arith.constant dense<0.000000e+00> : vector<1x128xf32>
    %106 = tpu.matmul %104, %18, %cst_33 {dimension_numbers = #tpu.dot_dimension_numbers<[1], [0], [0], [1], [0, 0, 1, 1], [], []>} : vector<1x32xf32>, vector<32x128xf32>, vector<1x128xf32> -> vector<1x128xf32>
    %107 = arith.addf %105, %106 : vector<1x128xf32>
    %108 = vector.extract_strided_slice %107 {offsets = [0, 0], sizes = [1, 96], strides = [1, 1]} : vector<1x128xf32> to vector<1x96xf32>
    %cst_34 = arith.constant 5.000000e-01 : f32
    %109 = vector.broadcast %cst_34 : f32 to vector<1x96xf32>
    %110 = arith.mulf %109, %108 : vector<1x96xf32>
    %111 = math.tanh %110 : vector<1x96xf32>
    %cst_35 = arith.constant 1.000000e+00 : f32
    %112 = vector.broadcast %cst_35 : f32 to vector<1x96xf32>
    %113 = arith.addf %111, %112 : vector<1x96xf32>
    %cst_36 = arith.constant 5.000000e-01 : f32
    %114 = vector.broadcast %cst_36 : f32 to vector<1x96xf32>
    %115 = arith.mulf %114, %113 : vector<1x96xf32>
    %116 = vector.extract_strided_slice %115 {offsets = [0, 0], sizes = [1, 32], strides = [1, 1]} : vector<1x96xf32> to vector<1x32xf32>
    %117 = vector.extract_strided_slice %115 {offsets = [0, 32], sizes = [1, 32], strides = [1, 1]} : vector<1x96xf32> to vector<1x32xf32>
    %118 = vector.extract_strided_slice %115 {offsets = [0, 64], sizes = [1, 32], strides = [1, 1]} : vector<1x96xf32> to vector<1x32xf32>
    %119 = vector.extract_strided_slice %107 {offsets = [0, 96], sizes = [1, 32], strides = [1, 1]} : vector<1x128xf32> to vector<1x32xf32>
    %120 = math.tanh %119 : vector<1x32xf32>
    %121 = arith.mulf %117, %102 : vector<1x32xf32>
    %122 = arith.mulf %116, %120 : vector<1x32xf32>
    %123 = arith.addf %121, %122 : vector<1x32xf32>
    %124 = math.tanh %123 : vector<1x32xf32>
    %125 = arith.mulf %118, %124 : vector<1x32xf32>
    %126 = vector.extract_strided_slice %17 {offsets = [5, 0], sizes = [1, 128], strides = [1, 1]} : vector<8x128xf32> to vector<1x128xf32>
    %cst_37 = arith.constant dense<0.000000e+00> : vector<1x128xf32>
    %127 = tpu.matmul %125, %18, %cst_37 {dimension_numbers = #tpu.dot_dimension_numbers<[1], [0], [0], [1], [0, 0, 1, 1], [], []>} : vector<1x32xf32>, vector<32x128xf32>, vector<1x128xf32> -> vector<1x128xf32>
    %128 = arith.addf %126, %127 : vector<1x128xf32>
    %129 = vector.extract_strided_slice %128 {offsets = [0, 0], sizes = [1, 96], strides = [1, 1]} : vector<1x128xf32> to vector<1x96xf32>
    %cst_38 = arith.constant 5.000000e-01 : f32
    %130 = vector.broadcast %cst_38 : f32 to vector<1x96xf32>
    %131 = arith.mulf %130, %129 : vector<1x96xf32>
    %132 = math.tanh %131 : vector<1x96xf32>
    %cst_39 = arith.constant 1.000000e+00 : f32
    %133 = vector.broadcast %cst_39 : f32 to vector<1x96xf32>
    %134 = arith.addf %132, %133 : vector<1x96xf32>
    %cst_40 = arith.constant 5.000000e-01 : f32
    %135 = vector.broadcast %cst_40 : f32 to vector<1x96xf32>
    %136 = arith.mulf %135, %134 : vector<1x96xf32>
    %137 = vector.extract_strided_slice %136 {offsets = [0, 0], sizes = [1, 32], strides = [1, 1]} : vector<1x96xf32> to vector<1x32xf32>
    %138 = vector.extract_strided_slice %136 {offsets = [0, 32], sizes = [1, 32], strides = [1, 1]} : vector<1x96xf32> to vector<1x32xf32>
    %139 = vector.extract_strided_slice %136 {offsets = [0, 64], sizes = [1, 32], strides = [1, 1]} : vector<1x96xf32> to vector<1x32xf32>
    %140 = vector.extract_strided_slice %128 {offsets = [0, 96], sizes = [1, 32], strides = [1, 1]} : vector<1x128xf32> to vector<1x32xf32>
    %141 = math.tanh %140 : vector<1x32xf32>
    %142 = arith.mulf %138, %123 : vector<1x32xf32>
    %143 = arith.mulf %137, %141 : vector<1x32xf32>
    %144 = arith.addf %142, %143 : vector<1x32xf32>
    %145 = math.tanh %144 : vector<1x32xf32>
    %146 = arith.mulf %139, %145 : vector<1x32xf32>
    %147 = vector.extract_strided_slice %17 {offsets = [6, 0], sizes = [1, 128], strides = [1, 1]} : vector<8x128xf32> to vector<1x128xf32>
    %cst_41 = arith.constant dense<0.000000e+00> : vector<1x128xf32>
    %148 = tpu.matmul %146, %18, %cst_41 {dimension_numbers = #tpu.dot_dimension_numbers<[1], [0], [0], [1], [0, 0, 1, 1], [], []>} : vector<1x32xf32>, vector<32x128xf32>, vector<1x128xf32> -> vector<1x128xf32>
    %149 = arith.addf %147, %148 : vector<1x128xf32>
    %150 = vector.extract_strided_slice %149 {offsets = [0, 0], sizes = [1, 96], strides = [1, 1]} : vector<1x128xf32> to vector<1x96xf32>
    %cst_42 = arith.constant 5.000000e-01 : f32
    %151 = vector.broadcast %cst_42 : f32 to vector<1x96xf32>
    %152 = arith.mulf %151, %150 : vector<1x96xf32>
    %153 = math.tanh %152 : vector<1x96xf32>
    %cst_43 = arith.constant 1.000000e+00 : f32
    %154 = vector.broadcast %cst_43 : f32 to vector<1x96xf32>
    %155 = arith.addf %153, %154 : vector<1x96xf32>
    %cst_44 = arith.constant 5.000000e-01 : f32
    %156 = vector.broadcast %cst_44 : f32 to vector<1x96xf32>
    %157 = arith.mulf %156, %155 : vector<1x96xf32>
    %158 = vector.extract_strided_slice %157 {offsets = [0, 0], sizes = [1, 32], strides = [1, 1]} : vector<1x96xf32> to vector<1x32xf32>
    %159 = vector.extract_strided_slice %157 {offsets = [0, 32], sizes = [1, 32], strides = [1, 1]} : vector<1x96xf32> to vector<1x32xf32>
    %160 = vector.extract_strided_slice %157 {offsets = [0, 64], sizes = [1, 32], strides = [1, 1]} : vector<1x96xf32> to vector<1x32xf32>
    %161 = vector.extract_strided_slice %149 {offsets = [0, 96], sizes = [1, 32], strides = [1, 1]} : vector<1x128xf32> to vector<1x32xf32>
    %162 = math.tanh %161 : vector<1x32xf32>
    %163 = arith.mulf %159, %144 : vector<1x32xf32>
    %164 = arith.mulf %158, %162 : vector<1x32xf32>
    %165 = arith.addf %163, %164 : vector<1x32xf32>
    %166 = math.tanh %165 : vector<1x32xf32>
    %167 = arith.mulf %160, %166 : vector<1x32xf32>
    %168 = vector.extract_strided_slice %17 {offsets = [7, 0], sizes = [1, 128], strides = [1, 1]} : vector<8x128xf32> to vector<1x128xf32>
    %cst_45 = arith.constant dense<0.000000e+00> : vector<1x128xf32>
    %169 = tpu.matmul %167, %18, %cst_45 {dimension_numbers = #tpu.dot_dimension_numbers<[1], [0], [0], [1], [0, 0, 1, 1], [], []>} : vector<1x32xf32>, vector<32x128xf32>, vector<1x128xf32> -> vector<1x128xf32>
    %170 = arith.addf %168, %169 : vector<1x128xf32>
    %171 = vector.extract_strided_slice %170 {offsets = [0, 0], sizes = [1, 96], strides = [1, 1]} : vector<1x128xf32> to vector<1x96xf32>
    %cst_46 = arith.constant 5.000000e-01 : f32
    %172 = vector.broadcast %cst_46 : f32 to vector<1x96xf32>
    %173 = arith.mulf %172, %171 : vector<1x96xf32>
    %174 = math.tanh %173 : vector<1x96xf32>
    %cst_47 = arith.constant 1.000000e+00 : f32
    %175 = vector.broadcast %cst_47 : f32 to vector<1x96xf32>
    %176 = arith.addf %174, %175 : vector<1x96xf32>
    %cst_48 = arith.constant 5.000000e-01 : f32
    %177 = vector.broadcast %cst_48 : f32 to vector<1x96xf32>
    %178 = arith.mulf %177, %176 : vector<1x96xf32>
    %179 = vector.extract_strided_slice %178 {offsets = [0, 0], sizes = [1, 32], strides = [1, 1]} : vector<1x96xf32> to vector<1x32xf32>
    %180 = vector.extract_strided_slice %178 {offsets = [0, 32], sizes = [1, 32], strides = [1, 1]} : vector<1x96xf32> to vector<1x32xf32>
    %181 = vector.extract_strided_slice %178 {offsets = [0, 64], sizes = [1, 32], strides = [1, 1]} : vector<1x96xf32> to vector<1x32xf32>
    %182 = vector.extract_strided_slice %170 {offsets = [0, 96], sizes = [1, 32], strides = [1, 1]} : vector<1x128xf32> to vector<1x32xf32>
    %183 = math.tanh %182 : vector<1x32xf32>
    %184 = arith.mulf %180, %165 : vector<1x32xf32>
    %185 = arith.mulf %179, %183 : vector<1x32xf32>
    %186 = arith.addf %184, %185 : vector<1x32xf32>
    %187 = math.tanh %186 : vector<1x32xf32>
    %188 = arith.mulf %181, %187 : vector<1x32xf32>
    %c0_49 = arith.constant 0 : index
    %c0_50 = arith.constant 0 : index
    %189 = vector.load %arg6[%c0_49, %c0_50] : memref<32x4xf32, #tpu.memory_space<vmem>>, vector<32x4xf32>
    %cst_51 = arith.constant dense<0.000000e+00> : vector<1x4xf32>
    %190 = tpu.matmul %188, %189, %cst_51 {dimension_numbers = #tpu.dot_dimension_numbers<[1], [0], [0], [1], [0, 0, 1, 1], [], []>} : vector<1x32xf32>, vector<32x4xf32>, vector<1x4xf32> -> vector<1x4xf32>
    %c0_52 = arith.constant 0 : index
    %c0_53 = arith.constant 0 : index
    %191 = vector.load %arg7[%c0_52, %c0_53] : memref<1x4xf32, #tpu.memory_space<vmem>>, vector<1x4xf32>
    %192 = arith.addf %190, %191 : vector<1x4xf32>
    %c0_54 = arith.constant 0 : index
    %c0_55 = arith.constant 0 : index
    %193 = vector.load %arg8[%c0_54, %c0_55] : memref<1x4xf32, #tpu.memory_space<vmem>>, vector<1x4xf32>
    tpu.vector_store %arg8[%c0_54, %c0_55], %192 {strides = array<i32>} : memref<1x4xf32, #tpu.memory_space<vmem>>, vector<1x4xf32>,
    return
  }
}

</mosaic_0001>

<llo_original>
// kernel: lstm_linear_before_after.1
$region0: #{lstm_linear_before_after.1}
  #allocation0 [shape = 'u32[]', space=smem, size = 0x4, offset = 0x4, fixed_abs, tag = 'smem constant byte address 0x4 - core index']
  #allocation1 [shape = 'u32[144,128]{1,0:T(1,128)}', space=vmem, size = 0x12000, scoped, tag = 'internal scratch']
  %s0 = inlined_call_operand.vmem [shape: f32[8,16], index: 0, kind: input, shape index: {}]
  %s1 = inlined_call_operand.hbm [shape: f32[16,32], index: 1, kind: input, shape index: {}]
  %s2 = inlined_call_operand.vmem [shape: f32[1,32], index: 2, kind: input, shape index: {}]
  %s3 = inlined_call_operand.vmem [shape: f32[32,128], index: 3, kind: input, shape index: {}]
  %s4 = inlined_call_operand.hbm [shape: f32[32,128], index: 4, kind: input, shape index: {}]
  %s5 = inlined_call_operand.vmem [shape: f32[1,128], index: 5, kind: input, shape index: {}]
  %s6 = inlined_call_operand.vmem [shape: f32[32,4], index: 6, kind: input, shape index: {}]
  %s7 = inlined_call_operand.vmem [shape: f32[1,4], index: 7, kind: input, shape index: {}]
  %s8 = inlined_call_operand.hbm [shape: f32[1,4], index: 8, kind: output, shape index: {}]
  %s9 = sld [smem:[#allocation0]]
  $region50: #{lstm_linear_before_after.1} parent=0
    _
  %s11 = ssub.s32 1, %s9
  %s12 = scalar_select 0, %s11, %s9
  $region1: #{lstm_linear_before_after.1} parent=0
    #allocation2 [shape = 'u8[8192]{0}', space=vmem, size = 0x2000, scoped, tag = 'input window, operand 1, single buffered']
    #allocation3 [shape = 's32[1]{0}', space=sflag, size = 0x4, scoped, tag = 'scoped memory for lstm_linear_before_after.1']
    #allocation4 [shape = 's32[1]{0}', space=sflag, size = 0x4, scoped, tag = 'scoped memory for lstm_linear_before_after.1']
    #allocation5 [shape = 'u8[16384]{0}', space=vmem, size = 0x4000, scoped, tag = 'input window, operand 4, single buffered']
    #allocation6 [shape = 's32[1]{0}', space=sflag, size = 0x4, scoped, tag = 'scoped memory for lstm_linear_before_after.1']
    #allocation7 [shape = 'u8[512]{0}', space=vmem, size = 0x400, scoped, tag = 'output window, operand 0, single buffered']
    %13 = vsyncpa [#allocation3], 0
    %14 = vsyncpa [#allocation6], 0
    %15 = vsyncpa [#allocation4], 0
    // Predicated region
    $region2: #{lstm_linear_before_after.1} parent=1 // pred_check
      _
    $region3: #{lstm_linear_before_after.1} parent=1 // pred_check_branch
      %17 = sbr.rel (0) target = $region5
    $region4: #{lstm_linear_before_after.1} parent=1 // pred_region
      _
    $region5: #{lstm_linear_before_after.1} parent=1 // pred_fallthru
      _
    // Predicated region
    $region6: #{lstm_linear_before_after.1} parent=1 // pred_check
      _
    $region7: #{lstm_linear_before_after.1} parent=1 // pred_check_branch
      %19 = sbr.rel (0) target = $region9
    $region8: #{lstm_linear_before_after.1} parent=1 // pred_region
      %s21 = ssub.s32 256, 256
      %22 = vsyncadd [#allocation3], %s21
      %s23 = sshll.u32 [#allocation2], 4
      %s24 = int_to_ptr.vmem [resolvable:$true] %s23
      %29 = dma.hbm_to_vmem [thread:$0]  %s1, 256, %s24, [#allocation3], 128, 128, 8
    $region9: #{lstm_linear_before_after.1} parent=1 // pred_fallthru
      _
    // Predicated region
    $region10: #{lstm_linear_before_after.1} parent=1 // pred_check
      _
    $region11: #{lstm_linear_before_after.1} parent=1 // pred_check_branch
      %31 = sbr.rel (0) target = $region13
    $region12: #{lstm_linear_before_after.1} parent=1 // pred_region
      _
    $region13: #{lstm_linear_before_after.1} parent=1 // pred_fallthru
      _
    // Predicated region
    $region14: #{lstm_linear_before_after.1} parent=1 // pred_check
      _
    $region15: #{lstm_linear_before_after.1} parent=1 // pred_check_branch
      %33 = sbr.rel (0) target = $region17
    $region16: #{lstm_linear_before_after.1} parent=1 // pred_region
      _
    $region17: #{lstm_linear_before_after.1} parent=1 // pred_fallthru
      _
    // Predicated region
    $region18: #{lstm_linear_before_after.1} parent=1 // pred_check
      _
    $region19: #{lstm_linear_before_after.1} parent=1 // pred_check_branch
      %35 = sbr.rel (0) target = $region21
    $region20: #{lstm_linear_before_after.1} parent=1 // pred_region
      %s37 = ssub.s32 512, 512
      %38 = vsyncadd [#allocation6], %s37
      %s39 = sshll.u32 [#allocation5], 4
      %s40 = int_to_ptr.vmem [resolvable:$true] %s39
      %45 = dma.hbm_to_vmem [thread:$0]  %s4, 512, %s40, [#allocation6], 128, 128, 8
    $region21: #{lstm_linear_before_after.1} parent=1 // pred_fallthru
      _
    // Predicated region
    $region22: #{lstm_linear_before_after.1} parent=1 // pred_check
      _
    $region23: #{lstm_linear_before_after.1} parent=1 // pred_check_branch
      %47 = sbr.rel (0) target = $region25
    $region24: #{lstm_linear_before_after.1} parent=1 // pred_region
      _
    $region25: #{lstm_linear_before_after.1} parent=1 // pred_fallthru
      _
    // Predicated region
    $region26: #{lstm_linear_before_after.1} parent=1 // pred_check
      _
    $region27: #{lstm_linear_before_after.1} parent=1 // pred_check_branch
      %49 = sbr.rel (0) target = $region29
    $region28: #{lstm_linear_before_after.1} parent=1 // pred_region
      _
    $region29: #{lstm_linear_before_after.1} parent=1 // pred_fallthru
      _
    // Predicated region
    $region30: #{lstm_linear_before_after.1} parent=1 // pred_check
      _
    $region31: #{lstm_linear_before_after.1} parent=1 // pred_check_branch
      %51 = sbr.rel (0) target = $region33
    $region32: #{lstm_linear_before_after.1} parent=1 // pred_region
      _
    $region33: #{lstm_linear_before_after.1} parent=1 // pred_fallthru
      _
    // Predicated region
    $region34: #{lstm_linear_before_after.1} parent=1 // pred_check
      _
    $region35: #{lstm_linear_before_after.1} parent=1 // pred_check_branch
      %53 = sbr.rel (0) target = $region37
    $region36: #{lstm_linear_before_after.1} parent=1 // pred_region
      %54 = dma.done [#allocation3], 256
    $region37: #{lstm_linear_before_after.1} parent=1 // pred_fallthru
      _
    // Predicated region
    $region38: #{lstm_linear_before_after.1} parent=1 // pred_check
      _
    $region39: #{lstm_linear_before_after.1} parent=1 // pred_check_branch
      %56 = sbr.rel (0) target = $region41
    $region40: #{lstm_linear_before_after.1} parent=1 // pred_region
      %57 = dma.done [#allocation6], 512
    $region41: #{lstm_linear_before_after.1} parent=1 // pred_fallthru
      _
    %v58 = vld [vmem:[%s0] sm:$0xff]
    %v59 = vld [vmem:[#allocation2] sm:$0xff]
    %v60 = vld [vmem:[#allocation2 + $0x8] sm:$0xff]
    %v61 = vld [vmem:[%s2] sm:$0x1]
    %v63 = vlaneseq
    %v64 = vshrl.u32 %v63, 7
    %v65 = vsub.s32 0, %v64
    %v66 = vrot.slane %v61, %v65
    %vm68 = vcmask 130048
    %v70 = vsel %vm68, %v58, 0
    %72 = vmatprep.subr.mxu0 0.0
    %73 = vmatpush1.msra.mxu0 %v59
    %74 = vmatprep.subr.mxu0 0.0
    %75 = vmatpush1.msra.mxu0 %v60
    %76 = vmatprep.subr.mxu0 0.0
    %77 = vmatpush1.msra.mxu0 0.0
    %78 = vmatprep.subr.mxu0 0.0
    %79 = vmatpush1.msra.mxu0 0.0
    %80 = vmatprep.subr.mxu0 0.0
    %81 = vmatpush1.msra.mxu0 0.0
    %82 = vmatprep.subr.mxu0 0.0
    %83 = vmatpush1.msra.mxu0 0.0
    %84 = vmatprep.subr.mxu0 0.0
    %85 = vmatpush1.msra.mxu0 0.0
    %86 = vmatprep.subr.mxu0 0.0
    %87 = vmatpush1.msra.mxu0 0.0
    %88 = vmatprep.subr.mxu0 0.0
    %89 = vmatpush1.msra.mxu0 0.0
    %90 = vmatprep.subr.mxu0 0.0
    %91 = vmatpush1.msra.mxu0 0.0
    %92 = vmatprep.subr.mxu0 0.0
    %93 = vmatpush1.msra.mxu0 0.0
    %94 = vmatprep.subr.mxu0 0.0
    %95 = vmatpush1.msra.mxu0 0.0
    %96 = vmatprep.subr.mxu0 0.0
    %97 = vmatpush1.msra.mxu0 0.0
    %98 = vmatprep.subr.mxu0 0.0
    %99 = vmatpush1.msra.mxu0 0.0
    %100 = vmatprep.subr.mxu0 0.0
    %101 = vmatpush1.msra.mxu0 0.0
    %102 = vmatprep.subr.mxu0 0.0
    %103 = vmatpush1.msra.mxu0 0.0
    %104 = vmatprep.subr.mxu0 0.0
    %105 = vmatpush1.msra.mxu0 0.0
    %106 = vmatprep.subr.mxu0 0.0
    %107 = vmatpush1.msra.mxu0 0.0
    %108 = vmatprep.subr.mxu0 0.0
    %109 = vmatpush1.msra.mxu0 0.0
    %110 = vmatprep.subr.mxu0 0.0
    %111 = vmatpush1.msra.mxu0 0.0
    %112 = vmatprep.subr.mxu0 0.0
    %113 = vmatpush1.msra.mxu0 0.0
    %114 = vmatprep.subr.mxu0 0.0
    %115 = vmatpush1.msra.mxu0 0.0
    %116 = vmatprep.subr.mxu0 0.0
    %117 = vmatpush1.msra.mxu0 0.0
    %118 = vmatprep.subr.mxu0 0.0
    %119 = vmatpush1.msra.mxu0 0.0
    %120 = vmatprep.subr.mxu0 0.0
    %121 = vmatpush1.msra.mxu0 0.0
    %122 = vmatprep.subr.mxu0 0.0
    %123 = vmatpush1.msra.mxu0 0.0
    %124 = vmatprep.subr.mxu0 0.0
    %125 = vmatpush1.msra.mxu0 0.0
    %126 = vmatprep.subr.mxu0 0.0
    %127 = vmatpush1.msra.mxu0 0.0
    %128 = vmatprep.subr.mxu0 0.0
    %129 = vmatpush1.msra.mxu0 0.0
    %130 = vmatprep.subr.mxu0 0.0
    %131 = vmatpush1.msra.mxu0 0.0
    %132 = vmatprep.subr.mxu0 0.0
    %133 = vmatpush1.msra.mxu0 0.0
    %134 = vmatprep.subr.mxu0 0.0
    %135 = vmatpush1.msra.mxu0 0.0
    %136 = vmatprep.mubr.f32.mxu0 0.0
    %137 = vmatmul.mubr.f32.gmra.mrb[0].mxu0 %v70
    %v138 = vpop.f32.mrb[0].mxu0
    %v139 = vadd.f32 %v66, %v138
    %v140 = vpop.f32.mrb[0].mxu0
    %141 = vdwg.mxu0
    %v142 = vmul.f32 %v139, 0.5
    %v143 = vtanh.pop %v142
    %v144 = vadd.f32 %v143, 1.0
    %v145 = vmul.f32 %v144, 0.5
    %v146 = vld [vmem:[%s3] sm:$0xff]
    %v147 = vld [vmem:[%s3 + $0x8] sm:$0xff]
    %v148 = vld [vmem:[%s3 + $0x10] sm:$0xff]
    %v149 = vld [vmem:[%s3 + $0x18] sm:$0xff]
    %v150 = vld [vmem:[%s5] sm:$0x1]
    %v152 = vlaneseq
    %v153 = vshrl.u32 %v152, 7
    %v154 = vsub.s32 0, %v153
    %v155 = vrot.slane %v150, %v154
    %vm157 = vcmask 261120
    %v159 = vsel %vm157, %v145, 0
    %161 = vmatprep.subr.mxu0 0.0
    %162 = vmatpush1.msra.mxu0 %v146
    %163 = vmatprep.subr.mxu0 0.0
    %164 = vmatpush1.msra.mxu0 %v147
    %165 = vmatprep.subr.mxu0 0.0
    %166 = vmatpush1.msra.mxu0 %v148
    %167 = vmatprep.subr.mxu0 0.0
    %168 = vmatpush1.msra.mxu0 %v149
    %169 = vmatprep.subr.mxu0 0.0
    %170 = vmatpush1.msra.mxu0 0.0
    %171 = vmatprep.subr.mxu0 0.0
    %172 = vmatpush1.msra.mxu0 0.0
    %173 = vmatprep.subr.mxu0 0.0
    %174 = vmatpush1.msra.mxu0 0.0
    %175 = vmatprep.subr.mxu0 0.0
    %176 = vmatpush1.msra.mxu0 0.0
    %177 = vmatprep.subr.mxu0 0.0
    %178 = vmatpush1.msra.mxu0 0.0
    %179 = vmatprep.subr.mxu0 0.0
    %180 = vmatpush1.msra.mxu0 0.0
    %181 = vmatprep.subr.mxu0 0.0
    %182 = vmatpush1.msra.mxu0 0.0
    %183 = vmatprep.subr.mxu0 0.0
    %184 = vmatpush1.msra.mxu0 0.0
    %185 = vmatprep.subr.mxu0 0.0
    %186 = vmatpush1.msra.mxu0 0.0
    %187 = vmatprep.subr.mxu0 0.0
    %188 = vmatpush1.msra.mxu0 0.0
    %189 = vmatprep.subr.mxu0 0.0
    %190 = vmatpush1.msra.mxu0 0.0
    %191 = vmatprep.subr.mxu0 0.0
    %192 = vmatpush1.msra.mxu0 0.0
    %193 = vmatprep.subr.mxu0 0.0
    %194 = vmatpush1.msra.mxu0 0.0
    %195 = vmatprep.subr.mxu0 0.0
    %196 = vmatpush1.msra.mxu0 0.0
    %197 = vmatprep.subr.mxu0 0.0
    %198 = vmatpush1.msra.mxu0 0.0
    %199 = vmatprep.subr.mxu0 0.0
    %200 = vmatpush1.msra.mxu0 0.0
    %201 = vmatprep.subr.mxu0 0.0
    %202 = vmatpush1.msra.mxu0 0.0
    %203 = vmatprep.subr.mxu0 0.0
    %204 = vmatpush1.msra.mxu0 0.0
    %205 = vmatprep.subr.mxu0 0.0
    %206 = vmatpush1.msra.mxu0 0.0
    %207 = vmatprep.subr.mxu0 0.0
    %208 = vmatpush1.msra.mxu0 0.0
    %209 = vmatprep.subr.mxu0 0.0
    %210 = vmatpush1.msra.mxu0 0.0
    %211 = vmatprep.subr.mxu0 0.0
    %212 = vmatpush1.msra.mxu0 0.0
    %213 = vmatprep.subr.mxu0 0.0
    %214 = vmatpush1.msra.mxu0 0.0
    %215 = vmatprep.subr.mxu0 0.0
    %216 = vmatpush1.msra.mxu0 0.0
    %217 = vmatprep.subr.mxu0 0.0
    %218 = vmatpush1.msra.mxu0 0.0
    %219 = vmatprep.subr.mxu0 0.0
    %220 = vmatpush1.msra.mxu0 0.0
    %221 = vmatprep.subr.mxu0 0.0
    %222 = vmatpush1.msra.mxu0 0.0
    %223 = vmatprep.subr.mxu0 0.0
    %224 = vmatpush1.msra.mxu0 0.0
    %225 = vmatprep.mubr.f32.mxu0 0.0
    %226 = vmatmul.mubr.f32.gmra.mrb[0].mxu0 %v159
    %v227 = vpop.f32.mrb[0].mxu0
    %v228 = vadd.f32 %v155, %v227
    %v229 = vpop.f32.mrb[0].mxu0
    %230 = vdwg.mxu0
    %v231 = vld [vmem:[#allocation5] sm:$0xff]
    %v232 = vld [vmem:[#allocation5 + $0x8] sm:$0xff]
    %v233 = vld [vmem:[#allocation5 + $0x10] sm:$0xff]
    %v234 = vld [vmem:[#allocation5 + $0x18] sm:$0xff]
    %v236 = vsel %vm157, 0.0, 0
    %238 = vmatprep.subr.mxu0 0.0
    %239 = vmatpush1.msra.mxu0 %v231
    %240 = vmatprep.subr.mxu0 0.0
    %241 = vmatpush1.msra.mxu0 %v232
    %242 = vmatprep.subr.mxu0 0.0
    %243 = vmatpush1.msra.mxu0 %v233
    %244 = vmatprep.subr.mxu0 0.0
    %245 = vmatpush1.msra.mxu0 %v234
    %246 = vmatprep.subr.mxu0 0.0
    %247 = vmatpush1.msra.mxu0 0.0
    %248 = vmatprep.subr.mxu0 0.0
    %249 = vmatpush1.msra.mxu0 0.0
    %250 = vmatprep.subr.mxu0 0.0
    %251 = vmatpush1.msra.mxu0 0.0
    %252 = vmatprep.subr.mxu0 0.0
    %253 = vmatpush1.msra.mxu0 0.0
    %254 = vmatprep.subr.mxu0 0.0
    %255 = vmatpush1.msra.mxu0 0.0
    %256 = vmatprep.subr.mxu0 0.0
    %257 = vmatpush1.msra.mxu0 0.0
    %258 = vmatprep.subr.mxu0 0.0
    %259 = vmatpush1.msra.mxu0 0.0
    %260 = vmatprep.subr.mxu0 0.0
    %261 = vmatpush1.msra.mxu0 0.0
    %262 = vmatprep.subr.mxu0 0.0
    %263 = vmatpush1.msra.mxu0 0.0
    %264 = vmatprep.subr.mxu0 0.0
    %265 = vmatpush1.msra.mxu0 0.0
    %266 = vmatprep.subr.mxu0 0.0
    %267 = vmatpush1.msra.mxu0 0.0
    %268 = vmatprep.subr.mxu0 0.0
    %269 = vmatpush1.msra.mxu0 0.0
    %270 = vmatprep.subr.mxu0 0.0
    %271 = vmatpush1.msra.mxu0 0.0
    %272 = vmatprep.subr.mxu0 0.0
    %273 = vmatpush1.msra.mxu0 0.0
    %274 = vmatprep.subr.mxu0 0.0
    %275 = vmatpush1.msra.mxu0 0.0
    %276 = vmatprep.subr.mxu0 0.0
    %277 = vmatpush1.msra.mxu0 0.0
    %278 = vmatprep.subr.mxu0 0.0
    %279 = vmatpush1.msra.mxu0 0.0
    %280 = vmatprep.subr.mxu0 0.0
    %281 = vmatpush1.msra.mxu0 0.0
    %282 = vmatprep.subr.mxu0 0.0
    %283 = vmatpush1.msra.mxu0 0.0
    %284 = vmatprep.subr.mxu0 0.0
    %285 = vmatpush1.msra.mxu0 0.0
    %286 = vmatprep.subr.mxu0 0.0
    %287 = vmatpush1.msra.mxu0 0.0
    %288 = vmatprep.subr.mxu0 0.0
    %289 = vmatpush1.msra.mxu0 0.0
    %290 = vmatprep.subr.mxu0 0.0
    %291 = vmatpush1.msra.mxu0 0.0
    %292 = vmatprep.subr.mxu0 0.0
    %293 = vmatpush1.msra.mxu0 0.0
    %294 = vmatprep.subr.mxu0 0.0
    %295 = vmatpush1.msra.mxu0 0.0
    %296 = vmatprep.subr.mxu0 0.0
    %297 = vmatpush1.msra.mxu0 0.0
    %298 = vmatprep.subr.mxu0 0.0
    %299 = vmatpush1.msra.mxu0 0.0
    %300 = vmatprep.subr.mxu0 0.0
    %301 = vmatpush1.msra.mxu0 0.0
    %302 = vmatprep.mubr.f32.mxu0 0.0
    %303 = vmatmul.mubr.f32.gmra.mrb[0].mxu0 %v236
    %v304 = vpop.f32.mrb[0].mxu0
    %v305 = vadd.f32 0.0, %v304
    %v306 = vpop.f32.mrb[0].mxu0
    %307 = vdwg.mxu0
    %v308 = vadd.f32 %v228, %v305
    %v309 = vmul.f32 %v308, 0.5
    %v310 = vtanh.pop %v309
    %v311 = vadd.f32 %v310, 1.0
    %v312 = vmul.f32 %v311, 0.5
    %v313 = vtanh.pop %v308
    %v314 = vmul.f32 %v312, 0.0
    %316 = vrot.lane.b32.xlu0 %v313, 32
    %v317 = vpop.permute.xlu0 %316
    %v319 = vmul.f32 %v312, %v317
    %321 = vrot.lane.b32.xlu0 %v319, 32
    %v322 = vpop.permute.xlu0 %321
    %v324 = vadd.f32 %v314, %v322
    %v325 = vtanh.pop %v324
    %327 = vrot.lane.b32.xlu0 %v325, 32
    %v328 = vpop.permute.xlu0 %327
    %v330 = vmul.f32 %v312, %v328
    %332 = vrot.lane.b32.xlu0 %v330, 64
    %v333 = vpop.permute.xlu0 %332
    %v334 = vsel %vm157, %v333, 0
    %336 = vmatprep.subr.mxu0 0.0
    %337 = vmatpush1.msra.mxu0 %v231
    %338 = vmatprep.subr.mxu0 0.0
    %339 = vmatpush1.msra.mxu0 %v232
    %340 = vmatprep.subr.mxu0 0.0
    %341 = vmatpush1.msra.mxu0 %v233
    %342 = vmatprep.subr.mxu0 0.0
    %343 = vmatpush1.msra.mxu0 %v234
    %344 = vmatprep.subr.mxu0 0.0
    %345 = vmatpush1.msra.mxu0 0.0
    %346 = vmatprep.subr.mxu0 0.0
    %347 = vmatpush1.msra.mxu0 0.0
    %348 = vmatprep.subr.mxu0 0.0
    %349 = vmatpush1.msra.mxu0 0.0
    %350 = vmatprep.subr.mxu0 0.0
    %351 = vmatpush1.msra.mxu0 0.0
    %352 = vmatprep.subr.mxu0 0.0
    %353 = vmatpush1.msra.mxu0 0.0
    %354 = vmatprep.subr.mxu0 0.0
    %355 = vmatpush1.msra.mxu0 0.0
    %356 = vmatprep.subr.mxu0 0.0
    %357 = vmatpush1.msra.mxu0 0.0
    %358 = vmatprep.subr.mxu0 0.0
    %359 = vmatpush1.msra.mxu0 0.0
    %360 = vmatprep.subr.mxu0 0.0
    %361 = vmatpush1.msra.mxu0 0.0
    %362 = vmatprep.subr.mxu0 0.0
    %363 = vmatpush1.msra.mxu0 0.0
    %364 = vmatprep.subr.mxu0 0.0
    %365 = vmatpush1.msra.mxu0 0.0
    %366 = vmatprep.subr.mxu0 0.0
    %367 = vmatpush1.msra.mxu0 0.0
    %368 = vmatprep.subr.mxu0 0.0
    %369 = vmatpush1.msra.mxu0 0.0
    %370 = vmatprep.subr.mxu0 0.0
    %371 = vmatpush1.msra.mxu0 0.0
    %372 = vmatprep.subr.mxu0 0.0
    %373 = vmatpush1.msra.mxu0 0.0
    %374 = vmatprep.subr.mxu0 0.0
    %375 = vmatpush1.msra.mxu0 0.0
    %376 = vmatprep.subr.mxu0 0.0
    %377 = vmatpush1.msra.mxu0 0.0
    %378 = vmatprep.subr.mxu0 0.0
    %379 = vmatpush1.msra.mxu0 0.0
    %380 = vmatprep.subr.mxu0 0.0
    %381 = vmatpush1.msra.mxu0 0.0
    %382 = vmatprep.subr.mxu0 0.0
    %383 = vmatpush1.msra.mxu0 0.0
    %384 = vmatprep.subr.mxu0 0.0
    %385 = vmatpush1.msra.mxu0 0.0
    %386 = vmatprep.subr.mxu0 0.0
    %387 = vmatpush1.msra.mxu0 0.0
    %388 = vmatprep.subr.mxu0 0.0
    %389 = vmatpush1.msra.mxu0 0.0
    %390 = vmatprep.subr.mxu0 0.0
    %391 = vmatpush1.msra.mxu0 0.0
    %392 = vmatprep.subr.mxu0 0.0
    %393 = vmatpush1.msra.mxu0 0.0
    %394 = vmatprep.subr.mxu0 0.0
    %395 = vmatpush1.msra.mxu0 0.0
    %396 = vmatprep.subr.mxu0 0.0
    %397 = vmatpush1.msra.mxu0 0.0
    %398 = vmatprep.subr.mxu0 0.0
    %399 = vmatpush1.msra.mxu0 0.0
    %400 = vmatprep.mubr.f32.mxu0 0.0
    %401 = vmatmul.mubr.f32.gmra.mrb[0].mxu0 %v334
    %v402 = vpop.f32.mrb[0].mxu0
    %v403 = vadd.f32 0.0, %v402
    %v404 = vpop.f32.mrb[0].mxu0
    %405 = vdwg.mxu0
    %v407 = vrot.slane %v403, 7
    %v409 = vadd.f32 %v228, %v407
    %v410 = vmul.f32 %v409, 0.5
    %v411 = vtanh.pop %v410
    %v412 = vadd.f32 %v411, 1.0
    %v413 = vmul.f32 %v412, 0.5
    %v414 = vtanh.pop %v409
    %v416 = vrot.slane %v324, 7
    %v418 = vmul.f32 %v413, %v416
    %420 = vrot.lane.b32.xlu0 %v414, 32
    %v421 = vpop.permute.xlu0 %420
    %v423 = vmul.f32 %v413, %v421
    %425 = vrot.lane.b32.xlu0 %v423, 32
    %v426 = vpop.permute.xlu0 %425
    %v428 = vadd.f32 %v418, %v426
    %v429 = vtanh.pop %v428
    %431 = vrot.lane.b32.xlu0 %v429, 32
    %v432 = vpop.permute.xlu0 %431
    %v434 = vmul.f32 %v413, %v432
    %v436 = vrot.slane %v434, 1
    %437 = vrot.lane.b32.xlu0 %v436, 64
    %v438 = vpop.permute.xlu0 %437
    %v439 = vsel %vm157, %v438, 0
    %441 = vmatprep.subr.mxu0 0.0
    %442 = vmatpush1.msra.mxu0 %v231
    %443 = vmatprep.subr.mxu0 0.0
    %444 = vmatpush1.msra.mxu0 %v232
    %445 = vmatprep.subr.mxu0 0.0
    %446 = vmatpush1.msra.mxu0 %v233
    %447 = vmatprep.subr.mxu0 0.0
    %448 = vmatpush1.msra.mxu0 %v234
    %449 = vmatprep.subr.mxu0 0.0
    %450 = vmatpush1.msra.mxu0 0.0
    %451 = vmatprep.subr.mxu0 0.0
    %452 = vmatpush1.msra.mxu0 0.0
    %453 = vmatprep.subr.mxu0 0.0
    %454 = vmatpush1.msra.mxu0 0.0
    %455 = vmatprep.subr.mxu0 0.0
    %456 = vmatpush1.msra.mxu0 0.0
    %457 = vmatprep.subr.mxu0 0.0
    %458 = vmatpush1.msra.mxu0 0.0
    %459 = vmatprep.subr.mxu0 0.0
    %460 = vmatpush1.msra.mxu0 0.0
    %461 = vmatprep.subr.mxu0 0.0
    %462 = vmatpush1.msra.mxu0 0.0
    %463 = vmatprep.subr.mxu0 0.0
    %464 = vmatpush1.msra.mxu0 0.0
    %465 = vmatprep.subr.mxu0 0.0
    %466 = vmatpush1.msra.mxu0 0.0
    %467 = vmatprep.subr.mxu0 0.0
    %468 = vmatpush1.msra.mxu0 0.0
    %469 = vmatprep.subr.mxu0 0.0
    %470 = vmatpush1.msra.mxu0 0.0
    %471 = vmatprep.subr.mxu0 0.0
    %472 = vmatpush1.msra.mxu0 0.0
    %473 = vmatprep.subr.mxu0 0.0
    %474 = vmatpush1.msra.mxu0 0.0
    %475 = vmatprep.subr.mxu0 0.0
    %476 = vmatpush1.msra.mxu0 0.0
    %477 = vmatprep.subr.mxu0 0.0
    %478 = vmatpush1.msra.mxu0 0.0
    %479 = vmatprep.subr.mxu0 0.0
    %480 = vmatpush1.msra.mxu0 0.0
    %481 = vmatprep.subr.mxu0 0.0
    %482 = vmatpush1.msra.mxu0 0.0
    %483 = vmatprep.subr.mxu0 0.0
    %484 = vmatpush1.msra.mxu0 0.0
    %485 = vmatprep.subr.mxu0 0.0
    %486 = vmatpush1.msra.mxu0 0.0
    %487 = vmatprep.subr.mxu0 0.0
    %488 = vmatpush1.msra.mxu0 0.0
    %489 = vmatprep.subr.mxu0 0.0
    %490 = vmatpush1.msra.mxu0 0.0
    %491 = vmatprep.subr.mxu0 0.0
    %492 = vmatpush1.msra.mxu0 0.0
    %493 = vmatprep.subr.mxu0 0.0
    %494 = vmatpush1.msra.mxu0 0.0
    %495 = vmatprep.subr.mxu0 0.0
    %496 = vmatpush1.msra.mxu0 0.0
    %497 = vmatprep.subr.mxu0 0.0
    %498 = vmatpush1.msra.mxu0 0.0
    %499 = vmatprep.subr.mxu0 0.0
    %500 = vmatpush1.msra.mxu0 0.0
    %501 = vmatprep.subr.mxu0 0.0
    %502 = vmatpush1.msra.mxu0 0.0
    %503 = vmatprep.subr.mxu0 0.0
    %504 = vmatpush1.msra.mxu0 0.0
    %505 = vmatprep.mubr.f32.mxu0 0.0
    %506 = vmatmul.mubr.f32.gmra.mrb[0].mxu0 %v439
    %v507 = vpop.f32.mrb[0].mxu0
    %v508 = vadd.f32 0.0, %v507
    %v509 = vpop.f32.mrb[0].mxu0
    %510 = vdwg.mxu0
    %v512 = vrot.slane %v508, 6
    %v514 = vadd.f32 %v228, %v512
    %v515 = vmul.f32 %v514, 0.5
    %v516 = vtanh.pop %v515
    %v517 = vadd.f32 %v516, 1.0
    %v518 = vmul.f32 %v517, 0.5
    %v519 = vtanh.pop %v514
    %v521 = vrot.slane %v428, 7
    %v523 = vmul.f32 %v518, %v521
    %525 = vrot.lane.b32.xlu0 %v519, 32
    %v526 = vpop.permute.xlu0 %525
    %v528 = vmul.f32 %v518, %v526
    %530 = vrot.lane.b32.xlu0 %v528, 32
    %v531 = vpop.permute.xlu0 %530
    %v533 = vadd.f32 %v523, %v531
    %v534 = vtanh.pop %v533
    %536 = vrot.lane.b32.xlu0 %v534, 32
    %v537 = vpop.permute.xlu0 %536
    %v539 = vmul.f32 %v518, %v537
    %v541 = vrot.slane %v539, 2
    %542 = vrot.lane.b32.xlu0 %v541, 64
    %v543 = vpop.permute.xlu0 %542
    %v544 = vsel %vm157, %v543, 0
    %546 = vmatprep.subr.mxu0 0.0
    %547 = vmatpush1.msra.mxu0 %v231
    %548 = vmatprep.subr.mxu0 0.0
    %549 = vmatpush1.msra.mxu0 %v232
    %550 = vmatprep.subr.mxu0 0.0
    %551 = vmatpush1.msra.mxu0 %v233
    %552 = vmatprep.subr.mxu0 0.0
    %553 = vmatpush1.msra.mxu0 %v234
    %554 = vmatprep.subr.mxu0 0.0
    %555 = vmatpush1.msra.mxu0 0.0
    %556 = vmatprep.subr.mxu0 0.0
    %557 = vmatpush1.msra.mxu0 0.0
    %558 = vmatprep.subr.mxu0 0.0
    %559 = vmatpush1.msra.mxu0 0.0
    %560 = vmatprep.subr.mxu0 0.0
    %561 = vmatpush1.msra.mxu0 0.0
    %562 = vmatprep.subr.mxu0 0.0
    %563 = vmatpush1.msra.mxu0 0.0
    %564 = vmatprep.subr.mxu0 0.0
    %565 = vmatpush1.msra.mxu0 0.0
    %566 = vmatprep.subr.mxu0 0.0
    %567 = vmatpush1.msra.mxu0 0.0
    %568 = vmatprep.subr.mxu0 0.0
    %569 = vmatpush1.msra.mxu0 0.0
    %570 = vmatprep.subr.mxu0 0.0
    %571 = vmatpush1.msra.mxu0 0.0
    %572 = vmatprep.subr.mxu0 0.0
    %573 = vmatpush1.msra.mxu0 0.0
    %574 = vmatprep.subr.mxu0 0.0
    %575 = vmatpush1.msra.mxu0 0.0
    %576 = vmatprep.subr.mxu0 0.0
    %577 = vmatpush1.msra.mxu0 0.0
    %578 = vmatprep.subr.mxu0 0.0
    %579 = vmatpush1.msra.mxu0 0.0
    %580 = vmatprep.subr.mxu0 0.0
    %581 = vmatpush1.msra.mxu0 0.0
    %582 = vmatprep.subr.mxu0 0.0
    %583 = vmatpush1.msra.mxu0 0.0
    %584 = vmatprep.subr.mxu0 0.0
    %585 = vmatpush1.msra.mxu0 0.0
    %586 = vmatprep.subr.mxu0 0.0
    %587 = vmatpush1.msra.mxu0 0.0
    %588 = vmatprep.subr.mxu0 0.0
    %589 = vmatpush1.msra.mxu0 0.0
    %590 = vmatprep.subr.mxu0 0.0
    %591 = vmatpush1.msra.mxu0 0.0
    %592 = vmatprep.subr.mxu0 0.0
    %593 = vmatpush1.msra.mxu0 0.0
    %594 = vmatprep.subr.mxu0 0.0
    %595 = vmatpush1.msra.mxu0 0.0
    %596 = vmatprep.subr.mxu0 0.0
    %597 = vmatpush1.msra.mxu0 0.0
    %598 = vmatprep.subr.mxu0 0.0
    %599 = vmatpush1.msra.mxu0 0.0
    %600 = vmatprep.subr.mxu0 0.0
    %601 = vmatpush1.msra.mxu0 0.0
    %602 = vmatprep.subr.mxu0 0.0
    %603 = vmatpush1.msra.mxu0 0.0
    %604 = vmatprep.subr.mxu0 0.0
    %605 = vmatpush1.msra.mxu0 0.0
    %606 = vmatprep.subr.mxu0 0.0
    %607 = vmatpush1.msra.mxu0 0.0
    %608 = vmatprep.subr.mxu0 0.0
    %609 = vmatpush1.msra.mxu0 0.0
    %610 = vmatprep.mubr.f32.mxu0 0.0
    %611 = vmatmul.mubr.f32.gmra.mrb[0].mxu0 %v544
    %v612 = vpop.f32.mrb[0].mxu0
    %v613 = vadd.f32 0.0, %v612
    %v614 = vpop.f32.mrb[0].mxu0
    %615 = vdwg.mxu0
    %v617 = vrot.slane %v613, 5
    %v619 = vadd.f32 %v228, %v617
    %v620 = vmul.f32 %v619, 0.5
    %v621 = vtanh.pop %v620
    %v622 = vadd.f32 %v621, 1.0
    %v623 = vmul.f32 %v622, 0.5
    %v624 = vtanh.pop %v619
    %v626 = vrot.slane %v533, 7
    %v628 = vmul.f32 %v623, %v626
    %630 = vrot.lane.b32.xlu0 %v624, 32
    %v631 = vpop.permute.xlu0 %630
    %v633 = vmul.f32 %v623, %v631
    %635 = vrot.lane.b32.xlu0 %v633, 32
    %v636 = vpop.permute.xlu0 %635
    %v638 = vadd.f32 %v628, %v636
    %v639 = vtanh.pop %v638
    %641 = vrot.lane.b32.xlu0 %v639, 32
    %v642 = vpop.permute.xlu0 %641
    %v644 = vmul.f32 %v623, %v642
    %v646 = vrot.slane %v644, 3
    %647 = vrot.lane.b32.xlu0 %v646, 64
    %v648 = vpop.permute.xlu0 %647
    %v649 = vsel %vm157, %v648, 0
    %651 = vmatprep.subr.mxu0 0.0
    %652 = vmatpush1.msra.mxu0 %v231
    %653 = vmatprep.subr.mxu0 0.0
    %654 = vmatpush1.msra.mxu0 %v232
    %655 = vmatprep.subr.mxu0 0.0
    %656 = vmatpush1.msra.mxu0 %v233
    %657 = vmatprep.subr.mxu0 0.0
    %658 = vmatpush1.msra.mxu0 %v234
    %659 = vmatprep.subr.mxu0 0.0
    %660 = vmatpush1.msra.mxu0 0.0
    %661 = vmatprep.subr.mxu0 0.0
    %662 = vmatpush1.msra.mxu0 0.0
    %663 = vmatprep.subr.mxu0 0.0
    %664 = vmatpush1.msra.mxu0 0.0
    %665 = vmatprep.subr.mxu0 0.0
    %666 = vmatpush1.msra.mxu0 0.0
    %667 = vmatprep.subr.mxu0 0.0
    %668 = vmatpush1.msra.mxu0 0.0
    %669 = vmatprep.subr.mxu0 0.0
    %670 = vmatpush1.msra.mxu0 0.0
    %671 = vmatprep.subr.mxu0 0.0
    %672 = vmatpush1.msra.mxu0 0.0
    %673 = vmatprep.subr.mxu0 0.0
    %674 = vmatpush1.msra.mxu0 0.0
    %675 = vmatprep.subr.mxu0 0.0
    %676 = vmatpush1.msra.mxu0 0.0
    %677 = vmatprep.subr.mxu0 0.0
    %678 = vmatpush1.msra.mxu0 0.0
    %679 = vmatprep.subr.mxu0 0.0
    %680 = vmatpush1.msra.mxu0 0.0
    %681 = vmatprep.subr.mxu0 0.0
    %682 = vmatpush1.msra.mxu0 0.0
    %683 = vmatprep.subr.mxu0 0.0
    %684 = vmatpush1.msra.mxu0 0.0
    %685 = vmatprep.subr.mxu0 0.0
    %686 = vmatpush1.msra.mxu0 0.0
    %687 = vmatprep.subr.mxu0 0.0
    %688 = vmatpush1.msra.mxu0 0.0
    %689 = vmatprep.subr.mxu0 0.0
    %690 = vmatpush1.msra.mxu0 0.0
    %691 = vmatprep.subr.mxu0 0.0
    %692 = vmatpush1.msra.mxu0 0.0
    %693 = vmatprep.subr.mxu0 0.0
    %694 = vmatpush1.msra.mxu0 0.0
    %695 = vmatprep.subr.mxu0 0.0
    %696 = vmatpush1.msra.mxu0 0.0
    %697 = vmatprep.subr.mxu0 0.0
    %698 = vmatpush1.msra.mxu0 0.0
    %699 = vmatprep.subr.mxu0 0.0
    %700 = vmatpush1.msra.mxu0 0.0
    %701 = vmatprep.subr.mxu0 0.0
    %702 = vmatpush1.msra.mxu0 0.0
    %703 = vmatprep.subr.mxu0 0.0
    %704 = vmatpush1.msra.mxu0 0.0
    %705 = vmatprep.subr.mxu0 0.0
    %706 = vmatpush1.msra.mxu0 0.0
    %707 = vmatprep.subr.mxu0 0.0
    %708 = vmatpush1.msra.mxu0 0.0
    %709 = vmatprep.subr.mxu0 0.0
    %710 = vmatpush1.msra.mxu0 0.0
    %711 = vmatprep.subr.mxu0 0.0
    %712 = vmatpush1.msra.mxu0 0.0
    %713 = vmatprep.subr.mxu0 0.0
    %714 = vmatpush1.msra.mxu0 0.0
    %715 = vmatprep.mubr.f32.mxu0 0.0
    %716 = vmatmul.mubr.f32.gmra.mrb[0].mxu0 %v649
    %v717 = vpop.f32.mrb[0].mxu0
    %v718 = vadd.f32 0.0, %v717
    %v719 = vpop.f32.mrb[0].mxu0
    %720 = vdwg.mxu0
    %v722 = vrot.slane %v718, 4
    %v724 = vadd.f32 %v228, %v722
    %v725 = vmul.f32 %v724, 0.5
    %v726 = vtanh.pop %v725
    %v727 = vadd.f32 %v726, 1.0
    %v728 = vmul.f32 %v727, 0.5
    %v729 = vtanh.pop %v724
    %v731 = vrot.slane %v638, 7
    %v733 = vmul.f32 %v728, %v731
    %735 = vrot.lane.b32.xlu0 %v729, 32
    %v736 = vpop.permute.xlu0 %735
    %v738 = vmul.f32 %v728, %v736
    %740 = vrot.lane.b32.xlu0 %v738, 32
    %v741 = vpop.permute.xlu0 %740
    %v743 = vadd.f32 %v733, %v741
    %v744 = vtanh.pop %v743
    %746 = vrot.lane.b32.xlu0 %v744, 32
    %v747 = vpop.permute.xlu0 %746
    %v749 = vmul.f32 %v728, %v747
    %v751 = vrot.slane %v749, 4
    %752 = vrot.lane.b32.xlu0 %v751, 64
    %v753 = vpop.permute.xlu0 %752
    %v754 = vsel %vm157, %v753, 0
    %756 = vmatprep.subr.mxu0 0.0
    %757 = vmatpush1.msra.mxu0 %v231
    %758 = vmatprep.subr.mxu0 0.0
    %759 = vmatpush1.msra.mxu0 %v232
    %760 = vmatprep.subr.mxu0 0.0
    %761 = vmatpush1.msra.mxu0 %v233
    %762 = vmatprep.subr.mxu0 0.0
    %763 = vmatpush1.msra.mxu0 %v234
    %764 = vmatprep.subr.mxu0 0.0
    %765 = vmatpush1.msra.mxu0 0.0
    %766 = vmatprep.subr.mxu0 0.0
    %767 = vmatpush1.msra.mxu0 0.0
    %768 = vmatprep.subr.mxu0 0.0
    %769 = vmatpush1.msra.mxu0 0.0
    %770 = vmatprep.subr.mxu0 0.0
    %771 = vmatpush1.msra.mxu0 0.0
    %772 = vmatprep.subr.mxu0 0.0
    %773 = vmatpush1.msra.mxu0 0.0
    %774 = vmatprep.subr.mxu0 0.0
    %775 = vmatpush1.msra.mxu0 0.0
    %776 = vmatprep.subr.mxu0 0.0
    %777 = vmatpush1.msra.mxu0 0.0
    %778 = vmatprep.subr.mxu0 0.0
    %779 = vmatpush1.msra.mxu0 0.0
    %780 = vmatprep.subr.mxu0 0.0
    %781 = vmatpush1.msra.mxu0 0.0
    %782 = vmatprep.subr.mxu0 0.0
    %783 = vmatpush1.msra.mxu0 0.0
    %784 = vmatprep.subr.mxu0 0.0
    %785 = vmatpush1.msra.mxu0 0.0
    %786 = vmatprep.subr.mxu0 0.0
    %787 = vmatpush1.msra.mxu0 0.0
    %788 = vmatprep.subr.mxu0 0.0
    %789 = vmatpush1.msra.mxu0 0.0
    %790 = vmatprep.subr.mxu0 0.0
    %791 = vmatpush1.msra.mxu0 0.0
    %792 = vmatprep.subr.mxu0 0.0
    %793 = vmatpush1.msra.mxu0 0.0
    %794 = vmatprep.subr.mxu0 0.0
    %795 = vmatpush1.msra.mxu0 0.0
    %796 = vmatprep.subr.mxu0 0.0
    %797 = vmatpush1.msra.mxu0 0.0
    %798 = vmatprep.subr.mxu0 0.0
    %799 = vmatpush1.msra.mxu0 0.0
    %800 = vmatprep.subr.mxu0 0.0
    %801 = vmatpush1.msra.mxu0 0.0
    %802 = vmatprep.subr.mxu0 0.0
    %803 = vmatpush1.msra.mxu0 0.0
    %804 = vmatprep.subr.mxu0 0.0
    %805 = vmatpush1.msra.mxu0 0.0
    %806 = vmatprep.subr.mxu0 0.0
    %807 = vmatpush1.msra.mxu0 0.0
    %808 = vmatprep.subr.mxu0 0.0
    %809 = vmatpush1.msra.mxu0 0.0
    %810 = vmatprep.subr.mxu0 0.0
    %811 = vmatpush1.msra.mxu0 0.0
    %812 = vmatprep.subr.mxu0 0.0
    %813 = vmatpush1.msra.mxu0 0.0
    %814 = vmatprep.subr.mxu0 0.0
    %815 = vmatpush1.msra.mxu0 0.0
    %816 = vmatprep.subr.mxu0 0.0
    %817 = vmatpush1.msra.mxu0 0.0
    %818 = vmatprep.subr.mxu0 0.0
    %819 = vmatpush1.msra.mxu0 0.0
    %820 = vmatprep.mubr.f32.mxu0 0.0
    %821 = vmatmul.mubr.f32.gmra.mrb[0].mxu0 %v754
    %v822 = vpop.f32.mrb[0].mxu0
    %v823 = vadd.f32 0.0, %v822
    %v824 = vpop.f32.mrb[0].mxu0
    %825 = vdwg.mxu0
    %v827 = vrot.slane %v823, 3
    %v829 = vadd.f32 %v228, %v827
    %v830 = vmul.f32 %v829, 0.5
    %v831 = vtanh.pop %v830
    %v832 = vadd.f32 %v831, 1.0
    %v833 = vmul.f32 %v832, 0.5
    %v834 = vtanh.pop %v829
    %v836 = vrot.slane %v743, 7
    %v838 = vmul.f32 %v833, %v836
    %840 = vrot.lane.b32.xlu0 %v834, 32
    %v841 = vpop.permute.xlu0 %840
    %v843 = vmul.f32 %v833, %v841
    %845 = vrot.lane.b32.xlu0 %v843, 32
    %v846 = vpop.permute.xlu0 %845
    %v848 = vadd.f32 %v838, %v846
    %v849 = vtanh.pop %v848
    %851 = vrot.lane.b32.xlu0 %v849, 32
    %v852 = vpop.permute.xlu0 %851
    %v854 = vmul.f32 %v833, %v852
    %v856 = vrot.slane %v854, 5
    %857 = vrot.lane.b32.xlu0 %v856, 64
    %v858 = vpop.permute.xlu0 %857
    %v859 = vsel %vm157, %v858, 0
    %861 = vmatprep.subr.mxu0 0.0
    %862 = vmatpush1.msra.mxu0 %v231
    %863 = vmatprep.subr.mxu0 0.0
    %864 = vmatpush1.msra.mxu0 %v232
    %865 = vmatprep.subr.mxu0 0.0
    %866 = vmatpush1.msra.mxu0 %v233
    %867 = vmatprep.subr.mxu0 0.0
    %868 = vmatpush1.msra.mxu0 %v234
    %869 = vmatprep.subr.mxu0 0.0
    %870 = vmatpush1.msra.mxu0 0.0
    %871 = vmatprep.subr.mxu0 0.0
    %872 = vmatpush1.msra.mxu0 0.0
    %873 = vmatprep.subr.mxu0 0.0
    %874 = vmatpush1.msra.mxu0 0.0
    %875 = vmatprep.subr.mxu0 0.0
    %876 = vmatpush1.msra.mxu0 0.0
    %877 = vmatprep.subr.mxu0 0.0
    %878 = vmatpush1.msra.mxu0 0.0
    %879 = vmatprep.subr.mxu0 0.0
    %880 = vmatpush1.msra.mxu0 0.0
    %881 = vmatprep.subr.mxu0 0.0
    %882 = vmatpush1.msra.mxu0 0.0
    %883 = vmatprep.subr.mxu0 0.0
    %884 = vmatpush1.msra.mxu0 0.0
    %885 = vmatprep.subr.mxu0 0.0
    %886 = vmatpush1.msra.mxu0 0.0
    %887 = vmatprep.subr.mxu0 0.0
    %888 = vmatpush1.msra.mxu0 0.0
    %889 = vmatprep.subr.mxu0 0.0
    %890 = vmatpush1.msra.mxu0 0.0
    %891 = vmatprep.subr.mxu0 0.0
    %892 = vmatpush1.msra.mxu0 0.0
    %893 = vmatprep.subr.mxu0 0.0
    %894 = vmatpush1.msra.mxu0 0.0
    %895 = vmatprep.subr.mxu0 0.0
    %896 = vmatpush1.msra.mxu0 0.0
    %897 = vmatprep.subr.mxu0 0.0
    %898 = vmatpush1.msra.mxu0 0.0
    %899 = vmatprep.subr.mxu0 0.0
    %900 = vmatpush1.msra.mxu0 0.0
    %901 = vmatprep.subr.mxu0 0.0
    %902 = vmatpush1.msra.mxu0 0.0
    %903 = vmatprep.subr.mxu0 0.0
    %904 = vmatpush1.msra.mxu0 0.0
    %905 = vmatprep.subr.mxu0 0.0
    %906 = vmatpush1.msra.mxu0 0.0
    %907 = vmatprep.subr.mxu0 0.0
    %908 = vmatpush1.msra.mxu0 0.0
    %909 = vmatprep.subr.mxu0 0.0
    %910 = vmatpush1.msra.mxu0 0.0
    %911 = vmatprep.subr.mxu0 0.0
    %912 = vmatpush1.msra.mxu0 0.0
    %913 = vmatprep.subr.mxu0 0.0
    %914 = vmatpush1.msra.mxu0 0.0
    %915 = vmatprep.subr.mxu0 0.0
    %916 = vmatpush1.msra.mxu0 0.0
    %917 = vmatprep.subr.mxu0 0.0
    %918 = vmatpush1.msra.mxu0 0.0
    %919 = vmatprep.subr.mxu0 0.0
    %920 = vmatpush1.msra.mxu0 0.0
    %921 = vmatprep.subr.mxu0 0.0
    %922 = vmatpush1.msra.mxu0 0.0
    %923 = vmatprep.subr.mxu0 0.0
    %924 = vmatpush1.msra.mxu0 0.0
    %925 = vmatprep.mubr.f32.mxu0 0.0
    %926 = vmatmul.mubr.f32.gmra.mrb[0].mxu0 %v859
    %v927 = vpop.f32.mrb[0].mxu0
    %v928 = vadd.f32 0.0, %v927
    %v929 = vpop.f32.mrb[0].mxu0
    %930 = vdwg.mxu0
    %v932 = vrot.slane %v928, 2
    %v934 = vadd.f32 %v228, %v932
    %v935 = vmul.f32 %v934, 0.5
    %v936 = vtanh.pop %v935
    %v937 = vadd.f32 %v936, 1.0
    %v938 = vmul.f32 %v937, 0.5
    %v939 = vtanh.pop %v934
    %v941 = vrot.slane %v848, 7
    %v943 = vmul.f32 %v938, %v941
    %945 = vrot.lane.b32.xlu0 %v939, 32
    %v946 = vpop.permute.xlu0 %945
    %v948 = vmul.f32 %v938, %v946
    %950 = vrot.lane.b32.xlu0 %v948, 32
    %v951 = vpop.permute.xlu0 %950
    %v953 = vadd.f32 %v943, %v951
    %v954 = vtanh.pop %v953
    %956 = vrot.lane.b32.xlu0 %v954, 32
    %v957 = vpop.permute.xlu0 %956
    %v959 = vmul.f32 %v938, %v957
    %v961 = vrot.slane %v959, 6
    %962 = vrot.lane.b32.xlu0 %v961, 64
    %v963 = vpop.permute.xlu0 %962
    %v964 = vsel %vm157, %v963, 0
    %966 = vmatprep.subr.mxu0 0.0
    %967 = vmatpush1.msra.mxu0 %v231
    %968 = vmatprep.subr.mxu0 0.0
    %969 = vmatpush1.msra.mxu0 %v232
    %970 = vmatprep.subr.mxu0 0.0
    %971 = vmatpush1.msra.mxu0 %v233
    %972 = vmatprep.subr.mxu0 0.0
    %973 = vmatpush1.msra.mxu0 %v234
    %974 = vmatprep.subr.mxu0 0.0
    %975 = vmatpush1.msra.mxu0 0.0
    %976 = vmatprep.subr.mxu0 0.0
    %977 = vmatpush1.msra.mxu0 0.0
    %978 = vmatprep.subr.mxu0 0.0
    %979 = vmatpush1.msra.mxu0 0.0
    %980 = vmatprep.subr.mxu0 0.0
    %981 = vmatpush1.msra.mxu0 0.0
    %982 = vmatprep.subr.mxu0 0.0
    %983 = vmatpush1.msra.mxu0 0.0
    %984 = vmatprep.subr.mxu0 0.0
    %985 = vmatpush1.msra.mxu0 0.0
    %986 = vmatprep.subr.mxu0 0.0
    %987 = vmatpush1.msra.mxu0 0.0
    %988 = vmatprep.subr.mxu0 0.0
    %989 = vmatpush1.msra.mxu0 0.0
    %990 = vmatprep.subr.mxu0 0.0
    %991 = vmatpush1.msra.mxu0 0.0
    %992 = vmatprep.subr.mxu0 0.0
    %993 = vmatpush1.msra.mxu0 0.0
    %994 = vmatprep.subr.mxu0 0.0
    %995 = vmatpush1.msra.mxu0 0.0
    %996 = vmatprep.subr.mxu0 0.0
    %997 = vmatpush1.msra.mxu0 0.0
    %998 = vmatprep.subr.mxu0 0.0
    %999 = vmatpush1.msra.mxu0 0.0
    %1000 = vmatprep.subr.mxu0 0.0
    %1001 = vmatpush1.msra.mxu0 0.0
    %1002 = vmatprep.subr.mxu0 0.0
    %1003 = vmatpush1.msra.mxu0 0.0
    %1004 = vmatprep.subr.mxu0 0.0
    %1005 = vmatpush1.msra.mxu0 0.0
    %1006 = vmatprep.subr.mxu0 0.0
    %1007 = vmatpush1.msra.mxu0 0.0
    %1008 = vmatprep.subr.mxu0 0.0
    %1009 = vmatpush1.msra.mxu0 0.0
    %1010 = vmatprep.subr.mxu0 0.0
    %1011 = vmatpush1.msra.mxu0 0.0
    %1012 = vmatprep.subr.mxu0 0.0
    %1013 = vmatpush1.msra.mxu0 0.0
    %1014 = vmatprep.subr.mxu0 0.0
    %1015 = vmatpush1.msra.mxu0 0.0
    %1016 = vmatprep.subr.mxu0 0.0
    %1017 = vmatpush1.msra.mxu0 0.0
    %1018 = vmatprep.subr.mxu0 0.0
    %1019 = vmatpush1.msra.mxu0 0.0
    %1020 = vmatprep.subr.mxu0 0.0
    %1021 = vmatpush1.msra.mxu0 0.0
    %1022 = vmatprep.subr.mxu0 0.0
    %1023 = vmatpush1.msra.mxu0 0.0
    %1024 = vmatprep.subr.mxu0 0.0
    %1025 = vmatpush1.msra.mxu0 0.0
    %1026 = vmatprep.subr.mxu0 0.0
    %1027 = vmatpush1.msra.mxu0 0.0
    %1028 = vmatprep.subr.mxu0 0.0
    %1029 = vmatpush1.msra.mxu0 0.0
    %1030 = vmatprep.mubr.f32.mxu0 0.0
    %1031 = vmatmul.mubr.f32.gmra.mrb[0].mxu0 %v964
    %v1032 = vpop.f32.mrb[0].mxu0
    %v1033 = vadd.f32 0.0, %v1032
    %v1034 = vpop.f32.mrb[0].mxu0
    %1035 = vdwg.mxu0
    %v1037 = vrot.slane %v1033, 1
    %v1039 = vadd.f32 %v228, %v1037
    %v1040 = vmul.f32 %v1039, 0.5
    %v1041 = vtanh.pop %v1040
    %v1042 = vadd.f32 %v1041, 1.0
    %v1043 = vmul.f32 %v1042, 0.5
    %v1044 = vtanh.pop %v1039
    %v1046 = vrot.slane %v953, 7
    %v1048 = vmul.f32 %v1043, %v1046
    %1050 = vrot.lane.b32.xlu0 %v1044, 32
    %v1051 = vpop.permute.xlu0 %1050
    %v1053 = vmul.f32 %v1043, %v1051
    %1055 = vrot.lane.b32.xlu0 %v1053, 32
    %v1056 = vpop.permute.xlu0 %1055
    %v1058 = vadd.f32 %v1048, %v1056
    %v1059 = vtanh.pop %v1058
    %1061 = vrot.lane.b32.xlu0 %v1059, 32
    %v1062 = vpop.permute.xlu0 %1061
    %v1064 = vmul.f32 %v1043, %v1062
    %v1065 = vld [vmem:[%s6] sm:$0xff]
    %v1066 = vld [vmem:[%s6 + $0x8] sm:$0xff]
    %v1067 = vld [vmem:[%s6 + $0x10] sm:$0xff]
    %v1068 = vld [vmem:[%s6 + $0x18] sm:$0xff]
    %v1069 = vld [vmem:[%s7] sm:$0x1]
    %v1071 = vrot.slane %v1064, 7
    %1072 = vrot.lane.b32.xlu0 %v1071, 64
    %v1073 = vpop.permute.xlu0 %1072
    %v1074 = vsel %vm157, %v1073, 0
    %1076 = vmatprep.subr.mxu0 0.0
    %1077 = vmatpush1.msra.mxu0 %v1065
    %1078 = vmatprep.subr.mxu0 0.0
    %1079 = vmatpush1.msra.mxu0 %v1066
    %1080 = vmatprep.subr.mxu0 0.0
    %1081 = vmatpush1.msra.mxu0 %v1067
    %1082 = vmatprep.subr.mxu0 0.0
    %1083 = vmatpush1.msra.mxu0 %v1068
    %1084 = vmatprep.subr.mxu0 0.0
    %1085 = vmatpush1.msra.mxu0 0.0
    %1086 = vmatprep.subr.mxu0 0.0
    %1087 = vmatpush1.msra.mxu0 0.0
    %1088 = vmatprep.subr.mxu0 0.0
    %1089 = vmatpush1.msra.mxu0 0.0
    %1090 = vmatprep.subr.mxu0 0.0
    %1091 = vmatpush1.msra.mxu0 0.0
    %1092 = vmatprep.subr.mxu0 0.0
    %1093 = vmatpush1.msra.mxu0 0.0
    %1094 = vmatprep.subr.mxu0 0.0
    %1095 = vmatpush1.msra.mxu0 0.0
    %1096 = vmatprep.subr.mxu0 0.0
    %1097 = vmatpush1.msra.mxu0 0.0
    %1098 = vmatprep.subr.mxu0 0.0
    %1099 = vmatpush1.msra.mxu0 0.0
    %1100 = vmatprep.subr.mxu0 0.0
    %1101 = vmatpush1.msra.mxu0 0.0
    %1102 = vmatprep.subr.mxu0 0.0
    %1103 = vmatpush1.msra.mxu0 0.0
    %1104 = vmatprep.subr.mxu0 0.0
    %1105 = vmatpush1.msra.mxu0 0.0
    %1106 = vmatprep.subr.mxu0 0.0
    %1107 = vmatpush1.msra.mxu0 0.0
    %1108 = vmatprep.subr.mxu0 0.0
    %1109 = vmatpush1.msra.mxu0 0.0
    %1110 = vmatprep.subr.mxu0 0.0
    %1111 = vmatpush1.msra.mxu0 0.0
    %1112 = vmatprep.subr.mxu0 0.0
    %1113 = vmatpush1.msra.mxu0 0.0
    %1114 = vmatprep.subr.mxu0 0.0
    %1115 = vmatpush1.msra.mxu0 0.0
    %1116 = vmatprep.subr.mxu0 0.0
    %1117 = vmatpush1.msra.mxu0 0.0
    %1118 = vmatprep.subr.mxu0 0.0
    %1119 = vmatpush1.msra.mxu0 0.0
    %1120 = vmatprep.subr.mxu0 0.0
    %1121 = vmatpush1.msra.mxu0 0.0
    %1122 = vmatprep.subr.mxu0 0.0
    %1123 = vmatpush1.msra.mxu0 0.0
    %1124 = vmatprep.subr.mxu0 0.0
    %1125 = vmatpush1.msra.mxu0 0.0
    %1126 = vmatprep.subr.mxu0 0.0
    %1127 = vmatpush1.msra.mxu0 0.0
    %1128 = vmatprep.subr.mxu0 0.0
    %1129 = vmatpush1.msra.mxu0 0.0
    %1130 = vmatprep.subr.mxu0 0.0
    %1131 = vmatpush1.msra.mxu0 0.0
    %1132 = vmatprep.subr.mxu0 0.0
    %1133 = vmatpush1.msra.mxu0 0.0
    %1134 = vmatprep.subr.mxu0 0.0
    %1135 = vmatpush1.msra.mxu0 0.0
    %1136 = vmatprep.subr.mxu0 0.0
    %1137 = vmatpush1.msra.mxu0 0.0
    %1138 = vmatprep.subr.mxu0 0.0
    %1139 = vmatpush1.msra.mxu0 0.0
    %1140 = vmatprep.mubr.f32.mxu0 0.0
    %1141 = vmatmul.mubr.f32.gmra.mrb[0].mxu0 %v1074
    %v1142 = vpop.f32.mrb[0].mxu0
    %v1143 = vadd.f32 %v1069, %v1142
    %v1144 = vpop.f32.mrb[0].mxu0
    %1145 = vdwg.mxu0
    %vm1146 = vcmask 24576
    %1147 = vst.msk [vmem:[#allocation7] sm:$0x1] %vm1146, %v1143
    // Predicated region
    $region42: #{lstm_linear_before_after.1} parent=1 // pred_check
      _
    $region43: #{lstm_linear_before_after.1} parent=1 // pred_check_branch
      %1149 = sbr.rel (0) target = $region45
    $region44: #{lstm_linear_before_after.1} parent=1 // pred_region
      %s1151 = ssub.s32 16, 16
      %1152 = vsyncadd [#allocation4], %s1151
      %s1154 = sshll.u32 [#allocation7], 4
      %s1155 = int_to_ptr.vmem [resolvable:$true] %s1154
      %1157 = dma.vmem_to_hbm [thread:$0]  %s1155, 16, %s8, [#allocation4]
    $region45: #{lstm_linear_before_after.1} parent=1 // pred_fallthru
      _
    // Predicated region
    $region46: #{lstm_linear_before_after.1} parent=1 // pred_check
      _
    $region47: #{lstm_linear_before_after.1} parent=1 // pred_check_branch
      %1159 = sbr.rel (0) target = $region49
    $region48: #{lstm_linear_before_after.1} parent=1 // pred_region
      %1160 = dma.done [#allocation4], 16
    $region49: #{lstm_linear_before_after.1} parent=1 // pred_fallthru
      _
    %1161 = vsyncpa [#allocation3], 1
    %1162 = vsyncpa [#allocation6], 1
    %1163 = vsyncpa [#allocation4], 1

</llo_original>
